<compile_context>
chip_gen: v7x
topology: tpu7x:2x2x1
jax: 0.10.0
libtpu: 0.0.40
codegen_flags: <defaults>
</compile_context>

<pallas_src>
import functools
import math

import jax
import jax.numpy as jnp
from jax import lax
from jax.experimental import pallas as pl
from jax.experimental.pallas import tpu as pltpu


def _round_up(x, m):
    return (x + m - 1) // m * m


# ----------------------------------------------------------------------------
# Pallas kernels
# ----------------------------------------------------------------------------
def _logits_kernel(x_ref, w_ref, b_ref, o_ref):
    # basic_net forward: logits = x @ W + b   (all dims lane/sublane padded)
    o_ref[...] = (
        jnp.dot(x_ref[...], w_ref[...], preferred_element_type=jnp.float32)
        + b_ref[...]
    )


def _pgd_linf_kernel(
    x0_ref, lo_ref, hi_ref, w_ref, b_ref, onehot_ref, out_ref,
    *, num_steps, step_signed
):
    # Full PGD (l-inf) loop on one batch tile, entirely in VMEM.
    wv = w_ref[...]                      # (Dp, CP) weights, reused by both matmuls
    lo = lo_ref[...]                     # max(orig - eps, 0)   (precomputed)
    hi = hi_ref[...]                     # min(orig + eps, 1)   (precomputed)
    onehot = onehot_ref[...]             # (TB, CP) one-hot targets (0 in padding)
    tb = x0_ref.shape[0]
    cp = b_ref.shape[1]
    # Hoist the bias broadcast: JAX does not CSE broadcast_in_dim across steps.
    bias = jnp.broadcast_to(b_ref[...], (tb, cp))

    def body(_, x):
        # forward: logits of the linear basic_net (padded classes carry -1e30 bias)
        logits = jnp.dot(x, wv, preferred_element_type=jnp.float32) + bias
        # numerically stable softmax; denominator reciprocal runs on the EUP slot
        zmax = jnp.max(logits, axis=-1, keepdims=True)
        e = jnp.exp(logits - zmax)
        p = e * pl.reciprocal(jnp.sum(e, axis=-1, keepdims=True), approx=True)
        # d(mean xent)/d logits ∝ (p - onehot); positive scaling never changes sign()
        g_logits = p - onehot
        # d/dx = g_logits @ W^T : contract the class dim of both (no materialized W^T)
        g_x = lax.dot_general(
            g_logits, wv, (((1,), (1,)), ((), ())),
            preferred_element_type=jnp.float32)
        # LinfStep.step + LinfStep.project (eps-ball ∩ [0,1] folded into lo/hi)
        return jnp.clip(x + step_signed * jnp.sign(g_x), lo, hi)

    # num_steps is a small compile-time constant -> unroll for scheduler visibility.
    out_ref[...] = lax.fori_loop(0, num_steps, body, x0_ref[...], unroll=True)


# ----------------------------------------------------------------------------
# Wrappers around pallas_call
# ----------------------------------------------------------------------------
def linear_logits(x_flat, w, b):
    B, D = x_flat.shape
    C = w.shape[1]
    f32 = jnp.float32
    CP = _round_up(max(C, 1), 128)
    Dp = _round_up(D, 128)
    TB = min(256, _round_up(B, 8))
    Bp = _round_up(B, TB)

    w_p = jnp.zeros((Dp, CP), f32).at[:D, :C].set(w.astype(f32))
    b_p = jnp.zeros((1, CP), f32).at[0, :C].set(b.astype(f32))
    x_p = jnp.zeros((Bp, Dp), f32).at[:B, :D].set(x_flat.astype(f32))

    out = pl.pallas_call(
        _logits_kernel,
        out_shape=jax.ShapeDtypeStruct((Bp, CP), f32),
        grid=(Bp // TB,),
        in_specs=[
            pl.BlockSpec((TB, Dp), lambda i: (i, 0)),
            pl.BlockSpec((Dp, CP), lambda i: (0, 0)),   # weights stay VMEM-resident
            pl.BlockSpec((1, CP), lambda i: (0, 0)),
        ],
        out_specs=pl.BlockSpec((TB, CP), lambda i: (i, 0)),
        compiler_params=pltpu.CompilerParams(dimension_semantics=("parallel",)),
    )(x_p, w_p, b_p)
    return out[:B, :C]


def pgd_attack_linf(x0, orig, w, b, onehot, *, num_steps, step_size, eps, targeted):
    B, D = x0.shape
    C = w.shape[1]
    f32 = jnp.float32
    CP = _round_up(max(C, 1), 128)       # lane-dense class dim
    Dp = _round_up(D, 128)               # lane-dense feature dim
    TB = min(256, _round_up(B, 8))       # batch tile (sublane-aligned)
    Bp = _round_up(B, TB)

    # Pad parameters: zero rows for padded features; -1e30 bias for padded classes
    # so their softmax probability is exactly 0 (they never affect the gradient).
    w_p = jnp.zeros((Dp, CP), f32).at[:D, :C].set(w.astype(f32))
    b_p = jnp.full((1, CP), -1e30, f32).at[0, :C].set(b.astype(f32))
    onehot_p = jnp.zeros((Bp, CP), f32).at[:B, :C].set(onehot.astype(f32))

    # Precompute eps-ball ∩ [0,1] bounds once (hoisted out of the PGD loop).
    lo = jnp.clip(orig - eps, 0.0, 1.0)
    hi = jnp.clip(orig + eps, 0.0, 1.0)

    def pad_bd(a):
        return jnp.zeros((Bp, Dp), f32).at[:B, :D].set(a.astype(f32))

    x0_p, lo_p, hi_p = pad_bd(x0), pad_bd(lo), pad_bd(hi)

    # Fold the targeted/untargeted sign into the step size (m = +-1).
    step_signed = float(step_size) * (-1.0 if targeted else 1.0)
    kernel = functools.partial(
        _pgd_linf_kernel, num_steps=int(num_steps), step_signed=step_signed)

    # VMEM budget (v7x has only 64 MiB physical): per-tile buffers are
    # double-buffered by the pipeline; leave headroom.
    tile_bytes = (4 * TB * Dp + TB * CP) * 4          # x0, lo, hi, out, onehot
    resident_bytes = (Dp * CP + CP) * 4               # W, bias
    vmem_need = 2 * (tile_bytes + resident_bytes)
    vmem_limit = int(min(max(2 * vmem_need, 32 * 1024 * 1024), 56 * 1024 * 1024))

    cost = pl.CostEstimate(
        flops=int(4 * num_steps * Bp * Dp * CP),          # fwd + bwd matmuls
        transcendentals=int(num_steps * Bp * CP),         # exp
        bytes_accessed=int((4 * Bp * Dp + Bp * CP + Dp * CP + CP) * 4),
    )

    out = pl.pallas_call(
        kernel,
        out_shape=jax.ShapeDtypeStruct((Bp, Dp), f32),
        grid=(Bp // TB,),
        in_specs=[
            pl.BlockSpec((TB, Dp), lambda i: (i, 0)),   # x0 (random-start perturbed)
            pl.BlockSpec((TB, Dp), lambda i: (i, 0)),   # lo bound
            pl.BlockSpec((TB, Dp), lambda i: (i, 0)),   # hi bound
            pl.BlockSpec((Dp, CP), lambda i: (0, 0)),   # W (VMEM-resident)
            pl.BlockSpec((1, CP), lambda i: (0, 0)),    # bias
            pl.BlockSpec((TB, CP), lambda i: (i, 0)),   # one-hot targets
        ],
        out_specs=pl.BlockSpec((TB, Dp), lambda i: (i, 0)),
        compiler_params=pltpu.CompilerParams(
            dimension_semantics=("parallel",),          # batch tiles -> 2 TCs on v7x
            vmem_limit_bytes=vmem_limit,
        ),
        cost_estimate=cost,
    )(x0_p, lo_p, hi_p, w_p, b_p, onehot_p)
    return out[:B, :D]


# ----------------------------------------------------------------------------
# AttackPGD module (JAX/Pallas port)
# ----------------------------------------------------------------------------
class AttackPGD:
    def __init__(self, basic_net_params, config):
        self.w, self.b = basic_net_params         # linear basic_net parameters
        self.rand = config["random_start"]
        self.step_size = config["step_size"]
        self.epsilon = config["epsilon"]
        self.num_steps = config["num_steps"]
        self._type = config["_type"]
        assert config["loss_func"] == "xent", "Only xent supported for now."
        self.targeted = False
        self.random_start = self.rand
        self.num_classes = self.b.shape[0]

    def basic_net(self, x_flat):
        return linear_logits(x_flat, self.w, self.b)

    def __call__(self, inputs, targets, attack, y_targets=None, key=None):
        B = inputs.shape[0]
        D = math.prod(inputs.shape[1:])
        x_flat = inputs.reshape(B, D).astype(jnp.float32)

        if not attack:
            return self.basic_net(x_flat), inputs

        if self._type != "linf":
            # TODO(synk): L2Step (per-sample grad l2-normalization + l2-ball renorm projection) not implemented.
            raise NotImplementedError("only linf PGD implemented in the Pallas port")

        x0 = x_flat
        if self.random_start:
            # LinfStep.random_perturb: x + U(-eps, eps), clamped to [0, 1] (glue, not hot path)
            noise = jax.random.uniform(
                key, x_flat.shape, minval=-1.0, maxval=1.0, dtype=jnp.float32
            ) * self.epsilon
            x0 = jnp.clip(x_flat + noise, 0.0, 1.0)

        labels = targets if not self.targeted else y_targets
        onehot = jax.nn.one_hot(labels, self.num_classes, dtype=jnp.float32)

        x_adv = pgd_attack_linf(
            x0, x_flat, self.w, self.b, onehot,
            num_steps=self.num_steps,
            step_size=self.step_size,
            eps=self.epsilon,
            targeted=self.targeted,
        )
        return x_adv.reshape(inputs.shape)


# ----------------------------------------------------------------------------
# Demo / smoke test
# ----------------------------------------------------------------------------
if __name__ == "__main__":
    key = jax.random.PRNGKey(0)
    k_in, k_tgt, k_w, k_noise = jax.random.split(key, 4)

    B, C, H, W = 2, 4, 16, 16
    NUM_CLASSES = 10
    D = C * H * W

    # "Images" in [0, 1], NCHW like PyTorch.
    inputs = jax.random.uniform(k_in, (B, C, H, W), dtype=jnp.float32)
    targets = jax.random.randint(k_tgt, (B,), 0, NUM_CLASSES, dtype=jnp.int32)

    # Deterministic synthetic basic_net parameters (linear classifier).
    w = jax.random.normal(k_w, (D, NUM_CLASSES), dtype=jnp.float32) * 0.05
    b = jnp.zeros((NUM_CLASSES,), dtype=jnp.float32)

    config = {
        "random_start": True,
        "step_size": 2.0 / 255.0,
        "epsilon": 8.0 / 255.0,
        "num_steps": 5,
        "_type": "linf",
        "loss_func": "xent",
    }

    model = AttackPGD((w, b), config)

    # attack=False path: (basic_net(inputs), inputs)
    logits, passthrough = model(inputs, targets, attack=False)

    # attack=True path: PGD adversarial example
    x_adv = model(inputs, targets, attack=True, key=k_noise)

    jax.block_until_ready((logits, passthrough, x_adv))

    assert logits.shape == (B, NUM_CLASSES)
    assert passthrough.shape == inputs.shape
    assert x_adv.shape == inputs.shape
    # adversarial example stays inside the eps-ball and in [0, 1]
    assert float(jnp.max(jnp.abs(x_adv - inputs))) <= config["epsilon"] + 1e-6
    assert float(jnp.min(x_adv)) >= 0.0 and float(jnp.max(x_adv)) <= 1.0

    print("KERNEL_OK")
</pallas_src>

<mosaic_0001>
module attributes {stable_mosaic.version = 11 : i64} {
  func.func @_logits_kernel(%arg0: i32, %arg1: memref<8x1024xf32, #tpu.memory_space<vmem>>, %arg2: memref<1024x128xf32, #tpu.memory_space<vmem>>, %arg3: memref<1x128xf32, #tpu.memory_space<vmem>>, %arg4: memref<8x128xf32, #tpu.memory_space<vmem>>) attributes {dimension_semantics = [#tpu.dimension_semantics<parallel>], iteration_bounds = array<i64: 1>, scalar_prefetch = 0 : i64, scratch_operands = 0 : i64, tpu.core_type = #tpu.core_type<tc>, window_params = [{transform_indices = @transform_0, window_bounds = array<i64: 8, 1024>}, {pipeline_mode = #tpu.pipeline_mode<synchronous>, transform_indices = @transform_1, window_bounds = array<i64: 1024, 128>}, {pipeline_mode = #tpu.pipeline_mode<synchronous>, transform_indices = @transform_2, window_bounds = array<i64: 1, 128>}, {transform_indices = @transform_3, window_bounds = array<i64: 8, 128>}]} {
    %c0 = arith.constant 0 : index
    %c0_0 = arith.constant 0 : index
    %0 = vector.load %arg1[%c0, %c0_0] : memref<8x1024xf32, #tpu.memory_space<vmem>>, vector<8x1024xf32>
    %c0_1 = arith.constant 0 : index
    %c0_2 = arith.constant 0 : index
    %1 = vector.load %arg2[%c0_1, %c0_2] : memref<1024x128xf32, #tpu.memory_space<vmem>>, vector<1024x128xf32>
    %cst = arith.constant dense<0.000000e+00> : vector<8x128xf32>
    %2 = tpu.matmul %0, %1, %cst {dimension_numbers = #tpu.dot_dimension_numbers<[1], [0], [0], [1], [0, 0, 1, 1], [], []>} : vector<8x1024xf32>, vector<1024x128xf32>, vector<8x128xf32> -> vector<8x128xf32>
    %c0_3 = arith.constant 0 : index
    %c0_4 = arith.constant 0 : index
    %3 = vector.load %arg3[%c0_3, %c0_4] : memref<1x128xf32, #tpu.memory_space<vmem>>, vector<1x128xf32>
    %4 = vector.broadcast %3 : vector<1x128xf32> to vector<8x128xf32>
    %5 = arith.addf %2, %4 : vector<8x128xf32>
    %c0_5 = arith.constant 0 : index
    %c0_6 = arith.constant 0 : index
    %6 = vector.load %arg4[%c0_5, %c0_6] : memref<8x128xf32, #tpu.memory_space<vmem>>, vector<8x128xf32>
    tpu.vector_store %arg4[%c0_5, %c0_6], %5 {strides = array<i32>} : memref<8x128xf32, #tpu.memory_space<vmem>>, vector<8x128xf32>,
    return
  }
  func.func @transform_0(%arg0: i32) -> (i32, i32) {
    %c0_i32 = arith.constant 0 : i32
    %c0_i32_0 = arith.constant 0 : i32
    return %arg0, %c0_i32 : i32, i32
  }
  func.func @transform_1(%arg0: i32) -> (i32, i32) {
    %c0_i32 = arith.constant 0 : i32
    %c0_i32_0 = arith.constant 0 : i32
    %c0_i32_1 = arith.constant 0 : i32
    return %c0_i32, %c0_i32_0 : i32, i32
  }
  func.func @transform_2(%arg0: i32) -> (i32, i32) {
    %c0_i32 = arith.constant 0 : i32
    %c0_i32_0 = arith.constant 0 : i32
    %c0_i32_1 = arith.constant 0 : i32
    return %c0_i32, %c0_i32_0 : i32, i32
  }
  func.func @transform_3(%arg0: i32) -> (i32, i32) {
    %c0_i32 = arith.constant 0 : i32
    %c0_i32_0 = arith.constant 0 : i32
    return %arg0, %c0_i32 : i32, i32
  }
}

</mosaic_0001>

<llo_original>
// kernel: tpu_custom_call.1
$region0: #{tpu_custom_call.1}
  #allocation0 [shape = 'u32[]', space=smem, size = 0x4, offset = 0x4, fixed_abs, tag = 'smem constant byte address 0x4 - core index']
  #allocation1 [shape = 'u32[144,128]{1,0:T(1,128)}', space=vmem, size = 0x12000, scoped, tag = 'internal scratch']
  %s0 = inlined_call_operand.hbm [shape: f32[8,1024], index: 0, kind: input, shape index: {}]
  %s1 = inlined_call_operand.hbm [shape: f32[1024,128], index: 1, kind: input, shape index: {}]
  %s2 = inlined_call_operand.vmem [shape: f32[1,128], index: 2, kind: input, shape index: {}]
  %s3 = inlined_call_operand.hbm [shape: f32[8,128], index: 3, kind: output, shape index: {}]
  %s4 = sld [smem:[#allocation0]]
  $region30: #{tpu_custom_call.1} parent=0
    _
  %s6 = ssub.s32 1, %s4
  %s7 = scalar_select 0, %s6, %s4
  $region1: #{tpu_custom_call.1} parent=0
    #allocation2 [shape = 'u8[32768]{0}', space=vmem, size = 0x8000, scoped, tag = 'input window, operand 0, single buffered']
    #allocation3 [shape = 's32[1]{0}', space=sflag, size = 0x4, scoped, tag = 'scoped memory for tpu_custom_call.1']
    #allocation4 [shape = 's32[1]{0}', space=sflag, size = 0x4, scoped, tag = 'scoped memory for tpu_custom_call.1']
    #allocation5 [shape = 'u8[524288]{0}', space=vmem, size = 0x80000, scoped, tag = 'input window, operand 1, single buffered']
    #allocation6 [shape = 's32[1]{0}', space=sflag, size = 0x4, scoped, tag = 'scoped memory for tpu_custom_call.1']
    #allocation7 [shape = 'u8[4096]{0}', space=vmem, size = 0x1000, scoped, tag = 'output window, operand 0, single buffered']
    %8 = vsyncpa [#allocation3], 0
    %9 = vsyncpa [#allocation6], 0
    %10 = vsyncpa [#allocation4], 0
    // Predicated region
    $region2: #{tpu_custom_call.1} parent=1 // pred_check
      _
    $region3: #{tpu_custom_call.1} parent=1 // pred_check_branch
      %12 = sbr.rel (0) target = $region5
    $region4: #{tpu_custom_call.1} parent=1 // pred_region
      %s14 = ssub.s32 1024, 1024
      %15 = vsyncadd [#allocation3], %s14
      %s17 = sshll.u32 [#allocation2], 4
      %s18 = int_to_ptr.vmem [resolvable:$true] %s17
      %20 = dma.hbm_to_vmem [thread:$0]  %s0, 1024, %s18, [#allocation3]
    $region5: #{tpu_custom_call.1} parent=1 // pred_fallthru
      _
    // Predicated region
    $region6: #{tpu_custom_call.1} parent=1 // pred_check
      _
    $region7: #{tpu_custom_call.1} parent=1 // pred_check_branch
      %22 = sbr.rel (0) target = $region9
    $region8: #{tpu_custom_call.1} parent=1 // pred_region
      %s24 = ssub.s32 16384, 16384
      %25 = vsyncadd [#allocation6], %s24
      %s26 = sshll.u32 [#allocation5], 4
      %s27 = int_to_ptr.vmem [resolvable:$true] %s26
      %32 = dma.hbm_to_vmem [thread:$0]  %s1, 16384, %s27, [#allocation6], 128, 128, 8
    $region9: #{tpu_custom_call.1} parent=1 // pred_fallthru
      _
    // Predicated region
    $region10: #{tpu_custom_call.1} parent=1 // pred_check
      _
    $region11: #{tpu_custom_call.1} parent=1 // pred_check_branch
      %34 = sbr.rel (0) target = $region13
    $region12: #{tpu_custom_call.1} parent=1 // pred_region
      _
    $region13: #{tpu_custom_call.1} parent=1 // pred_fallthru
      _
    // Predicated region
    $region14: #{tpu_custom_call.1} parent=1 // pred_check
      _
    $region15: #{tpu_custom_call.1} parent=1 // pred_check_branch
      %36 = sbr.rel (0) target = $region17
    $region16: #{tpu_custom_call.1} parent=1 // pred_region
      %37 = dma.done [#allocation3], 1024
    $region17: #{tpu_custom_call.1} parent=1 // pred_fallthru
      _
    // Predicated region
    $region18: #{tpu_custom_call.1} parent=1 // pred_check
      _
    $region19: #{tpu_custom_call.1} parent=1 // pred_check_branch
      %39 = sbr.rel (0) target = $region21
    $region20: #{tpu_custom_call.1} parent=1 // pred_region
      %40 = dma.done [#allocation6], 16384
    $region21: #{tpu_custom_call.1} parent=1 // pred_fallthru
      _
    %v41 = vld [vmem:[#allocation2] sm:$0xff]
    %v42 = vld [vmem:[#allocation2 + $0x8] sm:$0xff]
    %v43 = vld [vmem:[#allocation2 + $0x10] sm:$0xff]
    %v44 = vld [vmem:[#allocation2 + $0x18] sm:$0xff]
    %v45 = vld [vmem:[#allocation2 + $0x20] sm:$0xff]
    %v46 = vld [vmem:[#allocation2 + $0x28] sm:$0xff]
    %v47 = vld [vmem:[#allocation2 + $0x30] sm:$0xff]
    %v48 = vld [vmem:[#allocation2 + $0x38] sm:$0xff]
    %v49 = vld [vmem:[#allocation5] sm:$0xff]
    %v50 = vld [vmem:[#allocation5 + $0x8] sm:$0xff]
    %v51 = vld [vmem:[#allocation5 + $0x10] sm:$0xff]
    %v52 = vld [vmem:[#allocation5 + $0x18] sm:$0xff]
    %v53 = vld [vmem:[#allocation5 + $0x20] sm:$0xff]
    %v54 = vld [vmem:[#allocation5 + $0x28] sm:$0xff]
    %v55 = vld [vmem:[#allocation5 + $0x30] sm:$0xff]
    %v56 = vld [vmem:[#allocation5 + $0x38] sm:$0xff]
    %v57 = vld [vmem:[#allocation5 + $0x40] sm:$0xff]
    %v58 = vld [vmem:[#allocation5 + $0x48] sm:$0xff]
    %v59 = vld [vmem:[#allocation5 + $0x50] sm:$0xff]
    %v60 = vld [vmem:[#allocation5 + $0x58] sm:$0xff]
    %v61 = vld [vmem:[#allocation5 + $0x60] sm:$0xff]
    %v62 = vld [vmem:[#allocation5 + $0x68] sm:$0xff]
    %v63 = vld [vmem:[#allocation5 + $0x70] sm:$0xff]
    %v64 = vld [vmem:[#allocation5 + $0x78] sm:$0xff]
    %v65 = vld [vmem:[#allocation5 + $0x80] sm:$0xff]
    %v66 = vld [vmem:[#allocation5 + $0x88] sm:$0xff]
    %v67 = vld [vmem:[#allocation5 + $0x90] sm:$0xff]
    %v68 = vld [vmem:[#allocation5 + $0x98] sm:$0xff]
    %v69 = vld [vmem:[#allocation5 + $0xa0] sm:$0xff]
    %v70 = vld [vmem:[#allocation5 + $0xa8] sm:$0xff]
    %v71 = vld [vmem:[#allocation5 + $0xb0] sm:$0xff]
    %v72 = vld [vmem:[#allocation5 + $0xb8] sm:$0xff]
    %v73 = vld [vmem:[#allocation5 + $0xc0] sm:$0xff]
    %v74 = vld [vmem:[#allocation5 + $0xc8] sm:$0xff]
    %v75 = vld [vmem:[#allocation5 + $0xd0] sm:$0xff]
    %v76 = vld [vmem:[#allocation5 + $0xd8] sm:$0xff]
    %v77 = vld [vmem:[#allocation5 + $0xe0] sm:$0xff]
    %v78 = vld [vmem:[#allocation5 + $0xe8] sm:$0xff]
    %v79 = vld [vmem:[#allocation5 + $0xf0] sm:$0xff]
    %v80 = vld [vmem:[#allocation5 + $0xf8] sm:$0xff]
    %v81 = vld [vmem:[#allocation5 + $0x100] sm:$0xff]
    %v82 = vld [vmem:[#allocation5 + $0x108] sm:$0xff]
    %v83 = vld [vmem:[#allocation5 + $0x110] sm:$0xff]
    %v84 = vld [vmem:[#allocation5 + $0x118] sm:$0xff]
    %v85 = vld [vmem:[#allocation5 + $0x120] sm:$0xff]
    %v86 = vld [vmem:[#allocation5 + $0x128] sm:$0xff]
    %v87 = vld [vmem:[#allocation5 + $0x130] sm:$0xff]
    %v88 = vld [vmem:[#allocation5 + $0x138] sm:$0xff]
    %v89 = vld [vmem:[#allocation5 + $0x140] sm:$0xff]
    %v90 = vld [vmem:[#allocation5 + $0x148] sm:$0xff]
    %v91 = vld [vmem:[#allocation5 + $0x150] sm:$0xff]
    %v92 = vld [vmem:[#allocation5 + $0x158] sm:$0xff]
    %v93 = vld [vmem:[#allocation5 + $0x160] sm:$0xff]
    %v94 = vld [vmem:[#allocation5 + $0x168] sm:$0xff]
    %v95 = vld [vmem:[#allocation5 + $0x170] sm:$0xff]
    %v96 = vld [vmem:[#allocation5 + $0x178] sm:$0xff]
    %v97 = vld [vmem:[#allocation5 + $0x180] sm:$0xff]
    %v98 = vld [vmem:[#allocation5 + $0x188] sm:$0xff]
    %v99 = vld [vmem:[#allocation5 + $0x190] sm:$0xff]
    %v100 = vld [vmem:[#allocation5 + $0x198] sm:$0xff]
    %v101 = vld [vmem:[#allocation5 + $0x1a0] sm:$0xff]
    %v102 = vld [vmem:[#allocation5 + $0x1a8] sm:$0xff]
    %v103 = vld [vmem:[#allocation5 + $0x1b0] sm:$0xff]
    %v104 = vld [vmem:[#allocation5 + $0x1b8] sm:$0xff]
    %v105 = vld [vmem:[#allocation5 + $0x1c0] sm:$0xff]
    %v106 = vld [vmem:[#allocation5 + $0x1c8] sm:$0xff]
    %v107 = vld [vmem:[#allocation5 + $0x1d0] sm:$0xff]
    %v108 = vld [vmem:[#allocation5 + $0x1d8] sm:$0xff]
    %v109 = vld [vmem:[#allocation5 + $0x1e0] sm:$0xff]
    %v110 = vld [vmem:[#allocation5 + $0x1e8] sm:$0xff]
    %v111 = vld [vmem:[#allocation5 + $0x1f0] sm:$0xff]
    %v112 = vld [vmem:[#allocation5 + $0x1f8] sm:$0xff]
    %v113 = vld [vmem:[#allocation5 + $0x200] sm:$0xff]
    %v114 = vld [vmem:[#allocation5 + $0x208] sm:$0xff]
    %v115 = vld [vmem:[#allocation5 + $0x210] sm:$0xff]
    %v116 = vld [vmem:[#allocation5 + $0x218] sm:$0xff]
    %v117 = vld [vmem:[#allocation5 + $0x220] sm:$0xff]
    %v118 = vld [vmem:[#allocation5 + $0x228] sm:$0xff]
    %v119 = vld [vmem:[#allocation5 + $0x230] sm:$0xff]
    %v120 = vld [vmem:[#allocation5 + $0x238] sm:$0xff]
    %v121 = vld [vmem:[#allocation5 + $0x240] sm:$0xff]
    %v122 = vld [vmem:[#allocation5 + $0x248] sm:$0xff]
    %v123 = vld [vmem:[#allocation5 + $0x250] sm:$0xff]
    %v124 = vld [vmem:[#allocation5 + $0x258] sm:$0xff]
    %v125 = vld [vmem:[#allocation5 + $0x260] sm:$0xff]
    %v126 = vld [vmem:[#allocation5 + $0x268] sm:$0xff]
    %v127 = vld [vmem:[#allocation5 + $0x270] sm:$0xff]
    %v128 = vld [vmem:[#allocation5 + $0x278] sm:$0xff]
    %v129 = vld [vmem:[#allocation5 + $0x280] sm:$0xff]
    %v130 = vld [vmem:[#allocation5 + $0x288] sm:$0xff]
    %v131 = vld [vmem:[#allocation5 + $0x290] sm:$0xff]
    %v132 = vld [vmem:[#allocation5 + $0x298] sm:$0xff]
    %v133 = vld [vmem:[#allocation5 + $0x2a0] sm:$0xff]
    %v134 = vld [vmem:[#allocation5 + $0x2a8] sm:$0xff]
    %v135 = vld [vmem:[#allocation5 + $0x2b0] sm:$0xff]
    %v136 = vld [vmem:[#allocation5 + $0x2b8] sm:$0xff]
    %v137 = vld [vmem:[#allocation5 + $0x2c0] sm:$0xff]
    %v138 = vld [vmem:[#allocation5 + $0x2c8] sm:$0xff]
    %v139 = vld [vmem:[#allocation5 + $0x2d0] sm:$0xff]
    %v140 = vld [vmem:[#allocation5 + $0x2d8] sm:$0xff]
    %v141 = vld [vmem:[#allocation5 + $0x2e0] sm:$0xff]
    %v142 = vld [vmem:[#allocation5 + $0x2e8] sm:$0xff]
    %v143 = vld [vmem:[#allocation5 + $0x2f0] sm:$0xff]
    %v144 = vld [vmem:[#allocation5 + $0x2f8] sm:$0xff]
    %v145 = vld [vmem:[#allocation5 + $0x300] sm:$0xff]
    %v146 = vld [vmem:[#allocation5 + $0x308] sm:$0xff]
    %v147 = vld [vmem:[#allocation5 + $0x310] sm:$0xff]
    %v148 = vld [vmem:[#allocation5 + $0x318] sm:$0xff]
    %v149 = vld [vmem:[#allocation5 + $0x320] sm:$0xff]
    %v150 = vld [vmem:[#allocation5 + $0x328] sm:$0xff]
    %v151 = vld [vmem:[#allocation5 + $0x330] sm:$0xff]
    %v152 = vld [vmem:[#allocation5 + $0x338] sm:$0xff]
    %v153 = vld [vmem:[#allocation5 + $0x340] sm:$0xff]
    %v154 = vld [vmem:[#allocation5 + $0x348] sm:$0xff]
    %v155 = vld [vmem:[#allocation5 + $0x350] sm:$0xff]
    %v156 = vld [vmem:[#allocation5 + $0x358] sm:$0xff]
    %v157 = vld [vmem:[#allocation5 + $0x360] sm:$0xff]
    %v158 = vld [vmem:[#allocation5 + $0x368] sm:$0xff]
    %v159 = vld [vmem:[#allocation5 + $0x370] sm:$0xff]
    %v160 = vld [vmem:[#allocation5 + $0x378] sm:$0xff]
    %v161 = vld [vmem:[#allocation5 + $0x380] sm:$0xff]
    %v162 = vld [vmem:[#allocation5 + $0x388] sm:$0xff]
    %v163 = vld [vmem:[#allocation5 + $0x390] sm:$0xff]
    %v164 = vld [vmem:[#allocation5 + $0x398] sm:$0xff]
    %v165 = vld [vmem:[#allocation5 + $0x3a0] sm:$0xff]
    %v166 = vld [vmem:[#allocation5 + $0x3a8] sm:$0xff]
    %v167 = vld [vmem:[#allocation5 + $0x3b0] sm:$0xff]
    %v168 = vld [vmem:[#allocation5 + $0x3b8] sm:$0xff]
    %v169 = vld [vmem:[#allocation5 + $0x3c0] sm:$0xff]
    %v170 = vld [vmem:[#allocation5 + $0x3c8] sm:$0xff]
    %v171 = vld [vmem:[#allocation5 + $0x3d0] sm:$0xff]
    %v172 = vld [vmem:[#allocation5 + $0x3d8] sm:$0xff]
    %v173 = vld [vmem:[#allocation5 + $0x3e0] sm:$0xff]
    %v174 = vld [vmem:[#allocation5 + $0x3e8] sm:$0xff]
    %v175 = vld [vmem:[#allocation5 + $0x3f0] sm:$0xff]
    %v176 = vld [vmem:[#allocation5 + $0x3f8] sm:$0xff]
    %v177 = vld [vmem:[%s2] sm:$0x1]
    %v179 = vlaneseq
    %v180 = vshrl.u32 %v179, 7
    %v181 = vsub.s32 0, %v180
    %v182 = vrot.slane %v177, %v181
    %184 = vmatprep.subr.mxu0 0.0
    %185 = vmatpush1.msra.mxu0 %v49
    %186 = vmatprep.subr.mxu0 0.0
    %187 = vmatpush1.msra.mxu0 %v50
    %188 = vmatprep.subr.mxu0 0.0
    %189 = vmatpush1.msra.mxu0 %v51
    %190 = vmatprep.subr.mxu0 0.0
    %191 = vmatpush1.msra.mxu0 %v52
    %192 = vmatprep.subr.mxu0 0.0
    %193 = vmatpush1.msra.mxu0 %v53
    %194 = vmatprep.subr.mxu0 0.0
    %195 = vmatpush1.msra.mxu0 %v54
    %196 = vmatprep.subr.mxu0 0.0
    %197 = vmatpush1.msra.mxu0 %v55
    %198 = vmatprep.subr.mxu0 0.0
    %199 = vmatpush1.msra.mxu0 %v56
    %200 = vmatprep.subr.mxu0 0.0
    %201 = vmatpush1.msra.mxu0 %v57
    %202 = vmatprep.subr.mxu0 0.0
    %203 = vmatpush1.msra.mxu0 %v58
    %204 = vmatprep.subr.mxu0 0.0
    %205 = vmatpush1.msra.mxu0 %v59
    %206 = vmatprep.subr.mxu0 0.0
    %207 = vmatpush1.msra.mxu0 %v60
    %208 = vmatprep.subr.mxu0 0.0
    %209 = vmatpush1.msra.mxu0 %v61
    %210 = vmatprep.subr.mxu0 0.0
    %211 = vmatpush1.msra.mxu0 %v62
    %212 = vmatprep.subr.mxu0 0.0
    %213 = vmatpush1.msra.mxu0 %v63
    %214 = vmatprep.subr.mxu0 0.0
    %215 = vmatpush1.msra.mxu0 %v64
    %216 = vmatprep.subr.mxu0 0.0
    %217 = vmatpush1.msra.mxu0 %v65
    %218 = vmatprep.subr.mxu0 0.0
    %219 = vmatpush1.msra.mxu0 %v66
    %220 = vmatprep.subr.mxu0 0.0
    %221 = vmatpush1.msra.mxu0 %v67
    %222 = vmatprep.subr.mxu0 0.0
    %223 = vmatpush1.msra.mxu0 %v68
    %224 = vmatprep.subr.mxu0 0.0
    %225 = vmatpush1.msra.mxu0 %v69
    %226 = vmatprep.subr.mxu0 0.0
    %227 = vmatpush1.msra.mxu0 %v70
    %228 = vmatprep.subr.mxu0 0.0
    %229 = vmatpush1.msra.mxu0 %v71
    %230 = vmatprep.subr.mxu0 0.0
    %231 = vmatpush1.msra.mxu0 %v72
    %232 = vmatprep.subr.mxu0 0.0
    %233 = vmatpush1.msra.mxu0 %v73
    %234 = vmatprep.subr.mxu0 0.0
    %235 = vmatpush1.msra.mxu0 %v74
    %236 = vmatprep.subr.mxu0 0.0
    %237 = vmatpush1.msra.mxu0 %v75
    %238 = vmatprep.subr.mxu0 0.0
    %239 = vmatpush1.msra.mxu0 %v76
    %240 = vmatprep.subr.mxu0 0.0
    %241 = vmatpush1.msra.mxu0 %v77
    %242 = vmatprep.subr.mxu0 0.0
    %243 = vmatpush1.msra.mxu0 %v78
    %244 = vmatprep.subr.mxu0 0.0
    %245 = vmatpush1.msra.mxu0 %v79
    %246 = vmatprep.subr.mxu0 0.0
    %247 = vmatpush1.msra.mxu0 %v80
    %248 = vmatprep.mubr.f32.mxu0 %v42
    %249 = vmatmul.mubr.f32.gmra.mrb[0].mxu0 %v41
    %v250 = vpop.f32.mrb[0].mxu0
    %v251 = vadd.f32 %v182, %v250
    %v252 = vpop.f32.mrb[0].mxu0
    %253 = vdwg.mxu0
    %254 = vmatprep.subr.mxu0 0.0
    %255 = vmatpush1.msra.mxu0 %v81
    %256 = vmatprep.subr.mxu0 0.0
    %257 = vmatpush1.msra.mxu0 %v82
    %258 = vmatprep.subr.mxu0 0.0
    %259 = vmatpush1.msra.mxu0 %v83
    %260 = vmatprep.subr.mxu0 0.0
    %261 = vmatpush1.msra.mxu0 %v84
    %262 = vmatprep.subr.mxu0 0.0
    %263 = vmatpush1.msra.mxu0 %v85
    %264 = vmatprep.subr.mxu0 0.0
    %265 = vmatpush1.msra.mxu0 %v86
    %266 = vmatprep.subr.mxu0 0.0
    %267 = vmatpush1.msra.mxu0 %v87
    %268 = vmatprep.subr.mxu0 0.0
    %269 = vmatpush1.msra.mxu0 %v88
    %270 = vmatprep.subr.mxu0 0.0
    %271 = vmatpush1.msra.mxu0 %v89
    %272 = vmatprep.subr.mxu0 0.0
    %273 = vmatpush1.msra.mxu0 %v90
    %274 = vmatprep.subr.mxu0 0.0
    %275 = vmatpush1.msra.mxu0 %v91
    %276 = vmatprep.subr.mxu0 0.0
    %277 = vmatpush1.msra.mxu0 %v92
    %278 = vmatprep.subr.mxu0 0.0
    %279 = vmatpush1.msra.mxu0 %v93
    %280 = vmatprep.subr.mxu0 0.0
    %281 = vmatpush1.msra.mxu0 %v94
    %282 = vmatprep.subr.mxu0 0.0
    %283 = vmatpush1.msra.mxu0 %v95
    %284 = vmatprep.subr.mxu0 0.0
    %285 = vmatpush1.msra.mxu0 %v96
    %286 = vmatprep.subr.mxu0 0.0
    %287 = vmatpush1.msra.mxu0 %v97
    %288 = vmatprep.subr.mxu0 0.0
    %289 = vmatpush1.msra.mxu0 %v98
    %290 = vmatprep.subr.mxu0 0.0
    %291 = vmatpush1.msra.mxu0 %v99
    %292 = vmatprep.subr.mxu0 0.0
    %293 = vmatpush1.msra.mxu0 %v100
    %294 = vmatprep.subr.mxu0 0.0
    %295 = vmatpush1.msra.mxu0 %v101
    %296 = vmatprep.subr.mxu0 0.0
    %297 = vmatpush1.msra.mxu0 %v102
    %298 = vmatprep.subr.mxu0 0.0
    %299 = vmatpush1.msra.mxu0 %v103
    %300 = vmatprep.subr.mxu0 0.0
    %301 = vmatpush1.msra.mxu0 %v104
    %302 = vmatprep.subr.mxu0 0.0
    %303 = vmatpush1.msra.mxu0 %v105
    %304 = vmatprep.subr.mxu0 0.0
    %305 = vmatpush1.msra.mxu0 %v106
    %306 = vmatprep.subr.mxu0 0.0
    %307 = vmatpush1.msra.mxu0 %v107
    %308 = vmatprep.subr.mxu0 0.0
    %309 = vmatpush1.msra.mxu0 %v108
    %310 = vmatprep.subr.mxu0 0.0
    %311 = vmatpush1.msra.mxu0 %v109
    %312 = vmatprep.subr.mxu0 0.0
    %313 = vmatpush1.msra.mxu0 %v110
    %314 = vmatprep.subr.mxu0 0.0
    %315 = vmatpush1.msra.mxu0 %v111
    %316 = vmatprep.subr.mxu0 0.0
    %317 = vmatpush1.msra.mxu0 %v112
    %318 = vmatprep.mubr.f32.mxu0 %v44
    %319 = vmatmul.mubr.f32.gmra.mrb[0].mxu0 %v43
    %v320 = vpop.f32.mrb[0].mxu0
    %v321 = vadd.f32 %v251, %v320
    %v322 = vpop.f32.mrb[0].mxu0
    %323 = vdwg.mxu0
    %324 = vmatprep.subr.mxu0 0.0
    %325 = vmatpush1.msra.mxu0 %v113
    %326 = vmatprep.subr.mxu0 0.0
    %327 = vmatpush1.msra.mxu0 %v114
    %328 = vmatprep.subr.mxu0 0.0
    %329 = vmatpush1.msra.mxu0 %v115
    %330 = vmatprep.subr.mxu0 0.0
    %331 = vmatpush1.msra.mxu0 %v116
    %332 = vmatprep.subr.mxu0 0.0
    %333 = vmatpush1.msra.mxu0 %v117
    %334 = vmatprep.subr.mxu0 0.0
    %335 = vmatpush1.msra.mxu0 %v118
    %336 = vmatprep.subr.mxu0 0.0
    %337 = vmatpush1.msra.mxu0 %v119
    %338 = vmatprep.subr.mxu0 0.0
    %339 = vmatpush1.msra.mxu0 %v120
    %340 = vmatprep.subr.mxu0 0.0
    %341 = vmatpush1.msra.mxu0 %v121
    %342 = vmatprep.subr.mxu0 0.0
    %343 = vmatpush1.msra.mxu0 %v122
    %344 = vmatprep.subr.mxu0 0.0
    %345 = vmatpush1.msra.mxu0 %v123
    %346 = vmatprep.subr.mxu0 0.0
    %347 = vmatpush1.msra.mxu0 %v124
    %348 = vmatprep.subr.mxu0 0.0
    %349 = vmatpush1.msra.mxu0 %v125
    %350 = vmatprep.subr.mxu0 0.0
    %351 = vmatpush1.msra.mxu0 %v126
    %352 = vmatprep.subr.mxu0 0.0
    %353 = vmatpush1.msra.mxu0 %v127
    %354 = vmatprep.subr.mxu0 0.0
    %355 = vmatpush1.msra.mxu0 %v128
    %356 = vmatprep.subr.mxu0 0.0
    %357 = vmatpush1.msra.mxu0 %v129
    %358 = vmatprep.subr.mxu0 0.0
    %359 = vmatpush1.msra.mxu0 %v130
    %360 = vmatprep.subr.mxu0 0.0
    %361 = vmatpush1.msra.mxu0 %v131
    %362 = vmatprep.subr.mxu0 0.0
    %363 = vmatpush1.msra.mxu0 %v132
    %364 = vmatprep.subr.mxu0 0.0
    %365 = vmatpush1.msra.mxu0 %v133
    %366 = vmatprep.subr.mxu0 0.0
    %367 = vmatpush1.msra.mxu0 %v134
    %368 = vmatprep.subr.mxu0 0.0
    %369 = vmatpush1.msra.mxu0 %v135
    %370 = vmatprep.subr.mxu0 0.0
    %371 = vmatpush1.msra.mxu0 %v136
    %372 = vmatprep.subr.mxu0 0.0
    %373 = vmatpush1.msra.mxu0 %v137
    %374 = vmatprep.subr.mxu0 0.0
    %375 = vmatpush1.msra.mxu0 %v138
    %376 = vmatprep.subr.mxu0 0.0
    %377 = vmatpush1.msra.mxu0 %v139
    %378 = vmatprep.subr.mxu0 0.0
    %379 = vmatpush1.msra.mxu0 %v140
    %380 = vmatprep.subr.mxu0 0.0
    %381 = vmatpush1.msra.mxu0 %v141
    %382 = vmatprep.subr.mxu0 0.0
    %383 = vmatpush1.msra.mxu0 %v142
    %384 = vmatprep.subr.mxu0 0.0
    %385 = vmatpush1.msra.mxu0 %v143
    %386 = vmatprep.subr.mxu0 0.0
    %387 = vmatpush1.msra.mxu0 %v144
    %388 = vmatprep.mubr.f32.mxu0 %v46
    %389 = vmatmul.mubr.f32.gmra.mrb[0].mxu0 %v45
    %v390 = vpop.f32.mrb[0].mxu0
    %v391 = vadd.f32 %v321, %v390
    %v392 = vpop.f32.mrb[0].mxu0
    %393 = vdwg.mxu0
    %394 = vmatprep.subr.mxu0 0.0
    %395 = vmatpush1.msra.mxu0 %v145
    %396 = vmatprep.subr.mxu0 0.0
    %397 = vmatpush1.msra.mxu0 %v146
    %398 = vmatprep.subr.mxu0 0.0
    %399 = vmatpush1.msra.mxu0 %v147
    %400 = vmatprep.subr.mxu0 0.0
    %401 = vmatpush1.msra.mxu0 %v148
    %402 = vmatprep.subr.mxu0 0.0
    %403 = vmatpush1.msra.mxu0 %v149
    %404 = vmatprep.subr.mxu0 0.0
    %405 = vmatpush1.msra.mxu0 %v150
    %406 = vmatprep.subr.mxu0 0.0
    %407 = vmatpush1.msra.mxu0 %v151
    %408 = vmatprep.subr.mxu0 0.0
    %409 = vmatpush1.msra.mxu0 %v152
    %410 = vmatprep.subr.mxu0 0.0
    %411 = vmatpush1.msra.mxu0 %v153
    %412 = vmatprep.subr.mxu0 0.0
    %413 = vmatpush1.msra.mxu0 %v154
    %414 = vmatprep.subr.mxu0 0.0
    %415 = vmatpush1.msra.mxu0 %v155
    %416 = vmatprep.subr.mxu0 0.0
    %417 = vmatpush1.msra.mxu0 %v156
    %418 = vmatprep.subr.mxu0 0.0
    %419 = vmatpush1.msra.mxu0 %v157
    %420 = vmatprep.subr.mxu0 0.0
    %421 = vmatpush1.msra.mxu0 %v158
    %422 = vmatprep.subr.mxu0 0.0
    %423 = vmatpush1.msra.mxu0 %v159
    %424 = vmatprep.subr.mxu0 0.0
    %425 = vmatpush1.msra.mxu0 %v160
    %426 = vmatprep.subr.mxu0 0.0
    %427 = vmatpush1.msra.mxu0 %v161
    %428 = vmatprep.subr.mxu0 0.0
    %429 = vmatpush1.msra.mxu0 %v162
    %430 = vmatprep.subr.mxu0 0.0
    %431 = vmatpush1.msra.mxu0 %v163
    %432 = vmatprep.subr.mxu0 0.0
    %433 = vmatpush1.msra.mxu0 %v164
    %434 = vmatprep.subr.mxu0 0.0
    %435 = vmatpush1.msra.mxu0 %v165
    %436 = vmatprep.subr.mxu0 0.0
    %437 = vmatpush1.msra.mxu0 %v166
    %438 = vmatprep.subr.mxu0 0.0
    %439 = vmatpush1.msra.mxu0 %v167
    %440 = vmatprep.subr.mxu0 0.0
    %441 = vmatpush1.msra.mxu0 %v168
    %442 = vmatprep.subr.mxu0 0.0
    %443 = vmatpush1.msra.mxu0 %v169
    %444 = vmatprep.subr.mxu0 0.0
    %445 = vmatpush1.msra.mxu0 %v170
    %446 = vmatprep.subr.mxu0 0.0
    %447 = vmatpush1.msra.mxu0 %v171
    %448 = vmatprep.subr.mxu0 0.0
    %449 = vmatpush1.msra.mxu0 %v172
    %450 = vmatprep.subr.mxu0 0.0
    %451 = vmatpush1.msra.mxu0 %v173
    %452 = vmatprep.subr.mxu0 0.0
    %453 = vmatpush1.msra.mxu0 %v174
    %454 = vmatprep.subr.mxu0 0.0
    %455 = vmatpush1.msra.mxu0 %v175
    %456 = vmatprep.subr.mxu0 0.0
    %457 = vmatpush1.msra.mxu0 %v176
    %458 = vmatprep.mubr.f32.mxu0 %v48
    %459 = vmatmul.mubr.f32.gmra.mrb[0].mxu0 %v47
    %v460 = vpop.f32.mrb[0].mxu0
    %v461 = vadd.f32 %v391, %v460
    %v462 = vpop.f32.mrb[0].mxu0
    %463 = vdwg.mxu0
    %464 = vst [vmem:[#allocation7] sm:$0xff] %v461
    // Predicated region
    $region22: #{tpu_custom_call.1} parent=1 // pred_check
      _
    $region23: #{tpu_custom_call.1} parent=1 // pred_check_branch
      %466 = sbr.rel (0) target = $region25
    $region24: #{tpu_custom_call.1} parent=1 // pred_region
      %s468 = ssub.s32 128, 128
      %469 = vsyncadd [#allocation4], %s468
      %s471 = sshll.u32 [#allocation7], 4
      %s472 = int_to_ptr.vmem [resolvable:$true] %s471
      %474 = dma.vmem_to_hbm [thread:$0]  %s472, 128, %s3, [#allocation4]
    $region25: #{tpu_custom_call.1} parent=1 // pred_fallthru
      _
    // Predicated region
    $region26: #{tpu_custom_call.1} parent=1 // pred_check
      _
    $region27: #{tpu_custom_call.1} parent=1 // pred_check_branch
      %476 = sbr.rel (0) target = $region29
    $region28: #{tpu_custom_call.1} parent=1 // pred_region
      %477 = dma.done [#allocation4], 128
    $region29: #{tpu_custom_call.1} parent=1 // pred_fallthru
      _
    %478 = vsyncpa [#allocation3], 1
    %479 = vsyncpa [#allocation6], 1
    %480 = vsyncpa [#allocation4], 1

</llo_original>
